<compile_context>
chip_gen: v5e
topology: v5e:2x2
jax: 0.10.0
libtpu: 0.0.40
codegen_flags: <defaults>
</compile_context>

<pallas_src>
import jax
import jax.numpy as jnp
from jax.experimental import pallas as pl
from jax.experimental.pallas import tpu as pltpu

_LANE = 128
_BYPASS_BYTES = 64 * 1024            # below this, a kernel launch is pure overhead
_TARGET_BLOCK_BYTES = 4 * 1024 * 1024  # ~4 MiB blocks; ~16 MiB pipelined footprint


def _identity_kernel(x_ref, o_ref):
    # Pure passthrough: load the full tile and store it unchanged.
    o_ref[...] = x_ref[...]


def _sublane_pack(dtype) -> int:
    """Minimum row multiple so sub-32-bit dtypes keep full packed tiles."""
    itemsize = jnp.dtype(dtype).itemsize
    return max(8, 32 // max(1, itemsize))


def _choose_slab(total: int, last_dim: int) -> tuple[int, int]:
    """Pick a lane-dense (rows, cols) factorization of `total` elements."""
    # Prefer a wide, 128-aligned last dim so stores are unmasked full-width.
    for cols in (65536, 32768, 16384, 8192, 4096, 2048, 1024, 512, 256, 128):
        if total % cols == 0:
            return total // cols, cols
    # Fallback: keep the original trailing dim (full-extent block on lanes).
    if last_dim > 0 and total % last_dim == 0:
        return total // last_dim, last_dim
    return 1, total


def no_feature_extraction(
    x: jax.Array,
    *,
    use_kernel: bool | None = None,
    target_block_bytes: int = _TARGET_BLOCK_BYTES,
) -> jax.Array:
    """Forward pass of NoFeatureExtractionModule: returns input unchanged.

    By default the identity is a true no-op (returns `x`); set
    `use_kernel=True` to force the tiled Pallas VMEM-copy path.
    """
    x = jnp.asarray(x)
    orig_shape, dtype = x.shape, x.dtype
    total = x.size
    itemsize = jnp.dtype(dtype).itemsize

    if use_kernel is None:
        use_kernel = total * itemsize >= _BYPASS_BYTES
    if not use_kernel or total == 0:
        # Identity with no fused compute: skip the HBM round-trip entirely.
        return x

    last_dim = orig_shape[-1] if x.ndim >= 1 else 1
    rows, cols = _choose_slab(total, last_dim)
    x2 = x.reshape(rows, cols)  # contiguous row-major reshape: metadata only

    pack = _sublane_pack(dtype)
    rows_per_block = max(1, target_block_bytes // (cols * itemsize))
    rows_per_block = max(pack, (rows_per_block // pack) * pack)

    if rows_per_block >= rows:
        tile_rows = rows                      # single full-extent block
        grid = (1,)
    else:
        tile_rows = rows_per_block            # multiple of the sublane pack
        grid = (pl.cdiv(rows, tile_rows),)    # partial trailing block OK

    out = pl.pallas_call(
        _identity_kernel,
        out_shape=jax.ShapeDtypeStruct((rows, cols), dtype),
        grid_spec=pltpu.PrefetchScalarGridSpec(
            num_scalar_prefetch=0,
            grid=grid,
            in_specs=[pl.BlockSpec((tile_rows, cols), lambda i: (i, 0))],
            out_specs=pl.BlockSpec((tile_rows, cols), lambda i: (i, 0)),
        ),
        compiler_params=pltpu.CompilerParams(
            dimension_semantics=("parallel",),   # megacore-shardable on v7x
            vmem_limit_bytes=32 * 1024 * 1024,
        ),
    )(x2)

    return out.reshape(orig_shape)


class NoFeatureExtractionModuleJAX:
    """JAX/Pallas port of NoFeatureExtractionModule (no parameters)."""

    def __init__(self, input_size: int):
        self.output_size = input_size  # output size equals input size

    def __call__(self, x: jax.Array, **kwargs) -> jax.Array:
        return no_feature_extraction(x, **kwargs)


if __name__ == "__main__":
    key = jax.random.PRNGKey(0)
    batch, input_size = 16, 32  # small (N, input_size) demo shape
    x = jax.random.normal(key, (batch, input_size), dtype=jnp.float32)

    module = NoFeatureExtractionModuleJAX(input_size=input_size)

    # 1) Default path: tiny input -> identity bypass (zero HBM traffic).
    y = jax.block_until_ready(module(x))
    assert y.shape == x.shape and y.dtype == x.dtype
    assert bool(jnp.array_equal(y, x))

    # 2) Forced Pallas path on the same input (lane-dense single-block copy).
    y_k = jax.block_until_ready(module(x, use_kernel=True))
    assert y_k.shape == x.shape and y_k.dtype == x.dtype
    assert bool(jnp.array_equal(y_k, x))

    # 3) Odd, non-128-divisible shape through the kernel (full-extent block).
    x_odd = jax.random.normal(jax.random.PRNGKey(1), (17, 33), dtype=jnp.float32)
    y_odd = jax.block_until_ready(no_feature_extraction(x_odd, use_kernel=True))
    assert bool(jnp.array_equal(y_odd, x_odd))

    # 4) Multi-step grid with a partial trailing block (small block size forced
    #    so a small input still exercises the pipelined path; no pad/slice).
    x_grid = jax.random.normal(jax.random.PRNGKey(2), (100, 256), dtype=jnp.float32)
    y_grid = jax.block_until_ready(
        no_feature_extraction(x_grid, use_kernel=True, target_block_bytes=32 * 1024)
    )
    assert bool(jnp.array_equal(y_grid, x_grid))

    print("KERNEL_OK")
</pallas_src>

<mosaic_0001>
module attributes {stable_mosaic.version = 11 : i64} {
  func.func @_identity_kernel(%arg0: i32, %arg1: memref<1x512xf32, #tpu.memory_space<vmem>>, %arg2: memref<1x512xf32, #tpu.memory_space<vmem>>) attributes {dimension_semantics = [#tpu.dimension_semantics<parallel>], iteration_bounds = array<i64: 1>, scalar_prefetch = 0 : i64, scratch_operands = 0 : i64, tpu.core_type = #tpu.core_type<tc>, window_params = [{transform_indices = @transform_0, window_bounds = array<i64: 1, 512>}, {transform_indices = @transform_1, window_bounds = array<i64: 1, 512>}]} {
    %c0 = arith.constant 0 : index
    %c0_0 = arith.constant 0 : index
    %0 = vector.load %arg1[%c0, %c0_0] : memref<1x512xf32, #tpu.memory_space<vmem>>, vector<1x512xf32>
    %c0_1 = arith.constant 0 : index
    %c0_2 = arith.constant 0 : index
    %1 = vector.load %arg2[%c0_1, %c0_2] : memref<1x512xf32, #tpu.memory_space<vmem>>, vector<1x512xf32>
    tpu.vector_store %arg2[%c0_1, %c0_2], %0 {strides = array<i32>} : memref<1x512xf32, #tpu.memory_space<vmem>>, vector<1x512xf32>,
    return
  }
  func.func @transform_0(%arg0: i32) -> (i32, i32) {
    %c0_i32 = arith.constant 0 : i32
    %c0_i32_0 = arith.constant 0 : i32
    return %arg0, %c0_i32 : i32, i32
  }
  func.func @transform_1(%arg0: i32) -> (i32, i32) {
    %c0_i32 = arith.constant 0 : i32
    %c0_i32_0 = arith.constant 0 : i32
    return %arg0, %c0_i32 : i32, i32
  }
}

</mosaic_0001>

<llo_original>
// kernel: tpu_custom_call.1
$region0: #{tpu_custom_call.1}
  #allocation0 [shape = 'u32[]', space=smem, size = 0x4, offset = 0x4, fixed_abs, tag = 'smem constant byte address 0x4 - core index']
  #allocation1 [shape = 'u32[72,128]{1,0:T(1,128)}', space=vmem, size = 0x9000, scoped, tag = 'internal scratch']
  %s0 = inlined_call_operand.hbm [shape: f32[1,512], index: 0, kind: input, shape index: {}]
  %s1 = inlined_call_operand.hbm [shape: f32[1,512], index: 1, kind: output, shape index: {}]
  %s2 = sld [smem:[#allocation0]]
  $region18: #{tpu_custom_call.1} parent=0
    _
  %s4 = ssub.s32 1, %s2
  %s5 = scalar_select 0, %s4, %s2
  $region1: #{tpu_custom_call.1} parent=0
    #allocation2 [shape = 'u8[2048]{0}', space=vmem, size = 0x800, scoped, tag = 'input window, operand 0, single buffered']
    #allocation3 [shape = 's32[1]{0}', space=sflag, size = 0x4, scoped, tag = 'scoped memory for tpu_custom_call.1']
    #allocation4 [shape = 's32[1]{0}', space=sflag, size = 0x4, scoped, tag = 'scoped memory for tpu_custom_call.1']
    #allocation5 [shape = 'u8[2048]{0}', space=vmem, size = 0x800, scoped, tag = 'output window, operand 0, single buffered']
    %6 = vsyncpa [#allocation3], 0
    %7 = vsyncpa [#allocation4], 0
    // Predicated region
    $region2: #{tpu_custom_call.1} parent=1 // pred_check
      _
    $region3: #{tpu_custom_call.1} parent=1 // pred_check_branch
      %9 = sbr.rel (0) target = $region5
    $region4: #{tpu_custom_call.1} parent=1 // pred_region
      %11 = vsyncadd [#allocation3], 0
      %s13 = sshll.u32 %s0, 4
      %s14 = int_to_ptr.hbm [resolvable:$true] %s13
      %s15 = sshll.u32 [#allocation2], 4
      %s16 = int_to_ptr.vmem [resolvable:$true] %s15
      %18 = dma.hbm_to_vmem [thread:$0]  %s14, 64, %s16, [#allocation3]
    $region5: #{tpu_custom_call.1} parent=1 // pred_fallthru
      _
    // Predicated region
    $region6: #{tpu_custom_call.1} parent=1 // pred_check
      _
    $region7: #{tpu_custom_call.1} parent=1 // pred_check_branch
      %20 = sbr.rel (0) target = $region9
    $region8: #{tpu_custom_call.1} parent=1 // pred_region
      %22 = dma.done [#allocation3], 64
    $region9: #{tpu_custom_call.1} parent=1 // pred_fallthru
      _
    %v23 = vld [vmem:[#allocation2] sm:$0xf]
    %v24 = vlaneseq
    %vm25 = vcmp.ge.s32.totalorder %v24, 0
    %vm26 = vcmp.lt.s32.totalorder %v24, 512
    %vm27 = vmand %vm25, %vm26
    %28 = vst.msk [vmem:[#allocation5] sm:$0xf] %vm27, %v23
    // Predicated region
    $region10: #{tpu_custom_call.1} parent=1 // pred_check
      _
    $region11: #{tpu_custom_call.1} parent=1 // pred_check_branch
      %30 = sbr.rel (0) target = $region13
    $region12: #{tpu_custom_call.1} parent=1 // pred_region
      %32 = vsyncadd [#allocation4], 0
      %s34 = sshll.u32 [#allocation5], 4
      %s35 = int_to_ptr.vmem [resolvable:$true] %s34
      %s36 = sshll.u32 %s1, 4
      %s37 = int_to_ptr.hbm [resolvable:$true] %s36
      %39 = dma.vmem_to_hbm [thread:$0]  %s35, 64, %s37, [#allocation4]
    $region13: #{tpu_custom_call.1} parent=1 // pred_fallthru
      _
    // Predicated region
    $region14: #{tpu_custom_call.1} parent=1 // pred_check
      _
    $region15: #{tpu_custom_call.1} parent=1 // pred_check_branch
      %41 = sbr.rel (0) target = $region17
    $region16: #{tpu_custom_call.1} parent=1 // pred_region
      %43 = dma.done [#allocation4], 64
    $region17: #{tpu_custom_call.1} parent=1 // pred_fallthru
      _
    %44 = vsyncpa [#allocation3], 1
    %45 = vsyncpa [#allocation4], 1

</llo_original>
